<compile_context>
chip_gen: v7x
topology: tpu7x:2x2x1
jax: 0.10.0
libtpu: 0.0.40
codegen_flags: <defaults>
</compile_context>

<pallas_src>
import functools

import jax
import jax.numpy as jnp
from jax.experimental import pallas as pl
from jax.experimental.pallas import tpu as pltpu

# ----- model hyper-parameters (synthetic, small) -----
VOCAB_SIZE = 32   # vocab_size
N_PASSEND  = 8    # n_passend
TIME_RANGE = 64   # time_range
D_MODEL    = 32   # d_model
LN_EPS     = 1e-5

FUSED_ROWS = VOCAB_SIZE + N_PASSEND + TIME_RANGE   # 104 real rows
FUSED_V    = 128                                   # padded -> one 128-deep MXU pass
GAMMA_ROW  = FUSED_ROWS                            # row 104: LayerNorm gamma
BETA_ROW   = FUSED_ROWS + 1                        # row 105: LayerNorm beta
PACK       = 128 // D_MODEL                        # 4 tokens per 128-lane output row


def _round_up(a, m):
    return ((a + m - 1) // m) * m


def embedding_kernel(idx_ref, tab_ref, out_ref, *, eps):
    """idx_ref: (rows, PACK*3) pre-offset indices; token (4g+t) -> cols 3t..3t+2.
       tab_ref: (FUSED_V, D) fused table; rows 104/105 hold gamma/beta
                (indices never reference rows >= 104, so the gather is unaffected).
       out_ref: (rows, PACK*D) lane-dense packed output; row-major identical
                to (PACK*rows, D).
    """
    idx = idx_ref[...]                               # (rows, 12) int32
    rows = idx.shape[0]
    tab = tab_ref[...]                               # (128, 32) f32
    gamma = tab_ref[GAMMA_ROW:GAMMA_ROW + 1, :]      # (1, 32)
    beta  = tab_ref[BETA_ROW:BETA_ROW + 1, :]        # (1, 32)

    iota = jax.lax.broadcasted_iota(jnp.int32, (rows, FUSED_V), 1)

    normed = []
    for t in range(PACK):                            # statically unrolled (PACK=4)
        c = 3 * t
        # Combined one-hot: the three index ranges are disjoint, so OR-ing the
        # three compares is exactly the sum of the three one-hot rows.
        onehot = ((iota == idx[:, c + 0:c + 1]) |
                  (iota == idx[:, c + 1:c + 2]) |
                  (iota == idx[:, c + 2:c + 3])).astype(jnp.float32)   # (rows, 128)
        # One 128-deep MXU matmul = gather + sum of three embeddings (exact).
        emb = jnp.dot(onehot, tab, preferred_element_type=jnp.float32)  # (rows, 32)

        # LayerNorm stats over D (biased variance, matches torch.nn.LayerNorm).
        mean = jnp.mean(emb, axis=-1, keepdims=True)
        cen = emb - mean
        var = jnp.mean(cen * cen, axis=-1, keepdims=True)
        normed.append(cen * jax.lax.rsqrt(var + eps))

    # Pack 4 tokens into one 128-lane row -> full-width (unmasked) stores, and
    # the gamma/beta affine runs on full vregs.
    packed  = jnp.concatenate(normed, axis=-1)             # (rows, 128)
    gamma_t = jnp.concatenate([gamma] * PACK, axis=-1)     # (1, 128)
    beta_t  = jnp.concatenate([beta] * PACK, axis=-1)      # (1, 128)
    out_ref[...] = packed * gamma_t + beta_t


def embedding_forward(x, mjd, passend, params, *, tile_n=8192):
    """x, mjd, passend: (B, S) int32.  Returns (B, S, D_MODEL) float32."""
    B, S = x.shape
    N = B * S
    D = params["tok"].shape[1]
    assert PACK * D == 128, "lane-dense packing assumes d_model divides 128"

    # --- fused (128, D) table with gamma/beta folded into spare rows ---
    fused = jnp.zeros((FUSED_V, D), jnp.float32)
    fused = fused.at[:VOCAB_SIZE].set(params["tok"].astype(jnp.float32))
    fused = fused.at[VOCAB_SIZE:VOCAB_SIZE + N_PASSEND].set(
        params["passend"].astype(jnp.float32))
    fused = fused.at[VOCAB_SIZE + N_PASSEND:FUSED_ROWS].set(
        params["mjd"].astype(jnp.float32))
    fused = fused.at[GAMMA_ROW].set(params["gamma"].astype(jnp.float32))
    fused = fused.at[BETA_ROW].set(params["beta"].astype(jnp.float32))

    # --- pack + offset the three index streams into one (N, 3) stream ---
    idx = jnp.stack(
        [x.reshape(N).astype(jnp.int32),
         passend.reshape(N).astype(jnp.int32) + VOCAB_SIZE,
         mjd.reshape(N).astype(jnp.int32) + (VOCAB_SIZE + N_PASSEND)],
        axis=-1)                                              # (N, 3)

    # --- token tiling: big tiles, multiple of 32, >=2 grid steps when possible
    if N >= 64:                      # enough tokens: give each v7x core a tile
        tile_n = min(tile_n, _round_up(pl.cdiv(N, 2), 32))
    tile_n = max(32, _round_up(min(tile_n, _round_up(N, 32)), 32))
    n_pad = _round_up(N, tile_n)
    if n_pad != N:
        idx = jnp.pad(idx, ((0, n_pad - N), (0, 0)))  # padded tokens -> row 0, sliced off

    # token 4g+t -> row g, columns 3t..3t+2 (plain row-major reshape, free)
    idx_packed = idx.reshape(n_pad // PACK, PACK * 3)
    rows_pad, rows_tile = n_pad // PACK, tile_n // PACK

    grid = (n_pad // tile_n,)
    out = pl.pallas_call(
        functools.partial(embedding_kernel, eps=LN_EPS),
        out_shape=jax.ShapeDtypeStruct((rows_pad, PACK * D), jnp.float32),
        grid=grid,
        in_specs=[
            pl.BlockSpec((rows_tile, PACK * 3), lambda i: (i, 0)),  # per-tile indices
            pl.BlockSpec((FUSED_V, D), lambda i: (0, 0)),           # resident fused table
        ],
        out_specs=pl.BlockSpec((rows_tile, PACK * D), lambda i: (i, 0)),  # lane-dense out
        compiler_params=pltpu.CompilerParams(
            dimension_semantics=("parallel",),     # shard tiles over v7x's 2 TCs
            vmem_limit_bytes=32 * 1024 * 1024,     # explicit budget, fits every gen
        ),
    )(idx_packed, fused)

    # (rows_pad, 4*D) row-major is byte-identical to (n_pad, D): free reshape back.
    return out.reshape(n_pad, D)[:N].reshape(B, S, D)


def init_params(key):
    k1, k2, k3 = jax.random.split(key, 3)
    # nn.Embedding default init: N(0, 1)
    tok     = jax.random.normal(k1, (VOCAB_SIZE, D_MODEL), jnp.float32)
    passend = jax.random.normal(k2, (N_PASSEND,  D_MODEL), jnp.float32)
    mjd     = jax.random.normal(k3, (TIME_RANGE, D_MODEL), jnp.float32)
    # nn.LayerNorm default init: weight=1, bias=0
    gamma = jnp.ones((D_MODEL,), jnp.float32)
    beta  = jnp.zeros((D_MODEL,), jnp.float32)
    return {"tok": tok, "passend": passend, "mjd": mjd,
            "gamma": gamma, "beta": beta}


def reference_forward(x, mjd, passend, params):
    emb = (params["tok"][x]
           + params["passend"][passend]
           + params["mjd"][mjd])
    mean = jnp.mean(emb, axis=-1, keepdims=True)
    var = jnp.mean((emb - mean) ** 2, axis=-1, keepdims=True)
    normed = (emb - mean) / jnp.sqrt(var + LN_EPS)
    return normed * params["gamma"] + params["beta"]


if __name__ == "__main__":
    key = jax.random.PRNGKey(0)
    kp, kx, km, ks = jax.random.split(key, 4)

    params = init_params(kp)

    # Small shape (single tile, padded tail tokens exercised).
    B, S = 2, 8
    x       = jax.random.randint(kx, (B, S), 0, VOCAB_SIZE, dtype=jnp.int32)
    mjd     = jax.random.randint(km, (B, S), 0, TIME_RANGE, dtype=jnp.int32)
    passend = jax.random.randint(ks, (B, S), 0, N_PASSEND,  dtype=jnp.int32)

    out = jax.block_until_ready(embedding_forward(x, mjd, passend, params))
    ref = reference_forward(x, mjd, passend, params)
    assert out.shape == (B, S, D_MODEL)
    assert jnp.allclose(out, ref, atol=1e-5, rtol=1e-5)

    # Moderate shape: exercises the multi-step pipelined "parallel" grid path.
    B2, S2 = 4, 512
    kx2, km2, ks2 = jax.random.split(jax.random.PRNGKey(1), 3)
    x2       = jax.random.randint(kx2, (B2, S2), 0, VOCAB_SIZE, dtype=jnp.int32)
    mjd2     = jax.random.randint(km2, (B2, S2), 0, TIME_RANGE, dtype=jnp.int32)
    passend2 = jax.random.randint(ks2, (B2, S2), 0, N_PASSEND,  dtype=jnp.int32)

    out2 = jax.block_until_ready(embedding_forward(x2, mjd2, passend2, params))
    ref2 = reference_forward(x2, mjd2, passend2, params)
    assert out2.shape == (B2, S2, D_MODEL)
    assert jnp.allclose(out2, ref2, atol=1e-5, rtol=1e-5)

    print("KERNEL_OK")
</pallas_src>

<mosaic_0001>
module attributes {stable_mosaic.version = 11 : i64} {
  func.func @embedding_kernel(%arg0: i32, %arg1: memref<8x12xi32, #tpu.memory_space<vmem>>, %arg2: memref<128x32xf32, #tpu.memory_space<vmem>>, %arg3: memref<8x128xf32, #tpu.memory_space<vmem>>) attributes {dimension_semantics = [#tpu.dimension_semantics<parallel>], iteration_bounds = array<i64: 1>, scalar_prefetch = 0 : i64, scratch_operands = 0 : i64, tpu.core_type = #tpu.core_type<tc>, window_params = [{transform_indices = @transform_0, window_bounds = array<i64: 8, 12>}, {pipeline_mode = #tpu.pipeline_mode<synchronous>, transform_indices = @transform_1, window_bounds = array<i64: 128, 32>}, {transform_indices = @transform_2, window_bounds = array<i64: 8, 128>}]} {
    %c0 = arith.constant 0 : index
    %c0_0 = arith.constant 0 : index
    %0 = vector.load %arg1[%c0, %c0_0] : memref<8x12xi32, #tpu.memory_space<vmem>>, vector<8x12xi32>
    %c0_1 = arith.constant 0 : index
    %c0_2 = arith.constant 0 : index
    %1 = vector.load %arg2[%c0_1, %c0_2] : memref<128x32xf32, #tpu.memory_space<vmem>>, vector<128x32xf32>
    %c104 = arith.constant 104 : index
    %c0_3 = arith.constant 0 : index
    %2 = vector.load %arg2[%c104, %c0_3] : memref<128x32xf32, #tpu.memory_space<vmem>>, vector<1x32xf32>
    %c105 = arith.constant 105 : index
    %c0_4 = arith.constant 0 : index
    %3 = vector.load %arg2[%c105, %c0_4] : memref<128x32xf32, #tpu.memory_space<vmem>>, vector<1x32xf32>
    %4 = tpu.iota {dimensions = array<i32: 1>} : vector<8x128xi32>
    %5 = vector.extract_strided_slice %0 {offsets = [0, 0], sizes = [8, 1], strides = [1, 1]} : vector<8x12xi32> to vector<8x1xi32>
    %6 = vector.broadcast %5 : vector<8x1xi32> to vector<8x128xi32>
    %7 = arith.cmpi eq, %4, %6 : vector<8x128xi32>
    %8 = vector.extract_strided_slice %0 {offsets = [0, 1], sizes = [8, 1], strides = [1, 1]} : vector<8x12xi32> to vector<8x1xi32>
    %9 = vector.broadcast %8 : vector<8x1xi32> to vector<8x128xi32>
    %10 = arith.cmpi eq, %4, %9 : vector<8x128xi32>
    %11 = arith.ori %7, %10 : vector<8x128xi1>
    %12 = vector.extract_strided_slice %0 {offsets = [0, 2], sizes = [8, 1], strides = [1, 1]} : vector<8x12xi32> to vector<8x1xi32>
    %13 = vector.broadcast %12 : vector<8x1xi32> to vector<8x128xi32>
    %14 = arith.cmpi eq, %4, %13 : vector<8x128xi32>
    %15 = arith.ori %11, %14 : vector<8x128xi1>
    %16 = arith.extui %15 : vector<8x128xi1> to vector<8x128xi32>
    %17 = arith.sitofp %16 : vector<8x128xi32> to vector<8x128xf32>
    %cst = arith.constant dense<0.000000e+00> : vector<8x32xf32>
    %18 = tpu.matmul %17, %1, %cst {dimension_numbers = #tpu.dot_dimension_numbers<[1], [0], [0], [1], [0, 0, 1, 1], [], []>} : vector<8x128xf32>, vector<128x32xf32>, vector<8x32xf32> -> vector<8x32xf32>
    %cst_5 = arith.constant dense<0.000000e+00> : vector<8xf32>
    %19 = vector.multi_reduction <add>, %18, %cst_5 [1] : vector<8x32xf32> to vector<8xf32>
    %20 = vector.shape_cast %19 : vector<8xf32> to vector<8x1xf32>
    %cst_6 = arith.constant 3.200000e+01 : f32
    %21 = vector.broadcast %cst_6 : f32 to vector<8x1xf32>
    %22 = arith.divf %20, %21 : vector<8x1xf32>
    %23 = vector.broadcast %22 : vector<8x1xf32> to vector<8x32xf32>
    %24 = arith.subf %18, %23 : vector<8x32xf32>
    %25 = arith.mulf %24, %24 : vector<8x32xf32>
    %cst_7 = arith.constant dense<0.000000e+00> : vector<8xf32>
    %26 = vector.multi_reduction <add>, %25, %cst_7 [1] : vector<8x32xf32> to vector<8xf32>
    %27 = vector.shape_cast %26 : vector<8xf32> to vector<8x1xf32>
    %cst_8 = arith.constant 3.200000e+01 : f32
    %28 = vector.broadcast %cst_8 : f32 to vector<8x1xf32>
    %29 = arith.divf %27, %28 : vector<8x1xf32>
    %cst_9 = arith.constant 9.99999974E-6 : f32
    %30 = vector.broadcast %cst_9 : f32 to vector<8x1xf32>
    %31 = arith.addf %29, %30 : vector<8x1xf32>
    %32 = math.rsqrt %31 : vector<8x1xf32>
    %33 = vector.broadcast %32 : vector<8x1xf32> to vector<8x32xf32>
    %34 = arith.mulf %24, %33 : vector<8x32xf32>
    %35 = vector.extract_strided_slice %0 {offsets = [0, 3], sizes = [8, 1], strides = [1, 1]} : vector<8x12xi32> to vector<8x1xi32>
    %36 = vector.broadcast %35 : vector<8x1xi32> to vector<8x128xi32>
    %37 = arith.cmpi eq, %4, %36 : vector<8x128xi32>
    %38 = vector.extract_strided_slice %0 {offsets = [0, 4], sizes = [8, 1], strides = [1, 1]} : vector<8x12xi32> to vector<8x1xi32>
    %39 = vector.broadcast %38 : vector<8x1xi32> to vector<8x128xi32>
    %40 = arith.cmpi eq, %4, %39 : vector<8x128xi32>
    %41 = arith.ori %37, %40 : vector<8x128xi1>
    %42 = vector.extract_strided_slice %0 {offsets = [0, 5], sizes = [8, 1], strides = [1, 1]} : vector<8x12xi32> to vector<8x1xi32>
    %43 = vector.broadcast %42 : vector<8x1xi32> to vector<8x128xi32>
    %44 = arith.cmpi eq, %4, %43 : vector<8x128xi32>
    %45 = arith.ori %41, %44 : vector<8x128xi1>
    %46 = arith.extui %45 : vector<8x128xi1> to vector<8x128xi32>
    %47 = arith.sitofp %46 : vector<8x128xi32> to vector<8x128xf32>
    %cst_10 = arith.constant dense<0.000000e+00> : vector<8x32xf32>
    %48 = tpu.matmul %47, %1, %cst_10 {dimension_numbers = #tpu.dot_dimension_numbers<[1], [0], [0], [1], [0, 0, 1, 1], [], []>} : vector<8x128xf32>, vector<128x32xf32>, vector<8x32xf32> -> vector<8x32xf32>
    %cst_11 = arith.constant dense<0.000000e+00> : vector<8xf32>
    %49 = vector.multi_reduction <add>, %48, %cst_11 [1] : vector<8x32xf32> to vector<8xf32>
    %50 = vector.shape_cast %49 : vector<8xf32> to vector<8x1xf32>
    %cst_12 = arith.constant 3.200000e+01 : f32
    %51 = vector.broadcast %cst_12 : f32 to vector<8x1xf32>
    %52 = arith.divf %50, %51 : vector<8x1xf32>
    %53 = vector.broadcast %52 : vector<8x1xf32> to vector<8x32xf32>
    %54 = arith.subf %48, %53 : vector<8x32xf32>
    %55 = arith.mulf %54, %54 : vector<8x32xf32>
    %cst_13 = arith.constant dense<0.000000e+00> : vector<8xf32>
    %56 = vector.multi_reduction <add>, %55, %cst_13 [1] : vector<8x32xf32> to vector<8xf32>
    %57 = vector.shape_cast %56 : vector<8xf32> to vector<8x1xf32>
    %cst_14 = arith.constant 3.200000e+01 : f32
    %58 = vector.broadcast %cst_14 : f32 to vector<8x1xf32>
    %59 = arith.divf %57, %58 : vector<8x1xf32>
    %cst_15 = arith.constant 9.99999974E-6 : f32
    %60 = vector.broadcast %cst_15 : f32 to vector<8x1xf32>
    %61 = arith.addf %59, %60 : vector<8x1xf32>
    %62 = math.rsqrt %61 : vector<8x1xf32>
    %63 = vector.broadcast %62 : vector<8x1xf32> to vector<8x32xf32>
    %64 = arith.mulf %54, %63 : vector<8x32xf32>
    %65 = vector.extract_strided_slice %0 {offsets = [0, 6], sizes = [8, 1], strides = [1, 1]} : vector<8x12xi32> to vector<8x1xi32>
    %66 = vector.broadcast %65 : vector<8x1xi32> to vector<8x128xi32>
    %67 = arith.cmpi eq, %4, %66 : vector<8x128xi32>
    %68 = vector.extract_strided_slice %0 {offsets = [0, 7], sizes = [8, 1], strides = [1, 1]} : vector<8x12xi32> to vector<8x1xi32>
    %69 = vector.broadcast %68 : vector<8x1xi32> to vector<8x128xi32>
    %70 = arith.cmpi eq, %4, %69 : vector<8x128xi32>
    %71 = arith.ori %67, %70 : vector<8x128xi1>
    %72 = vector.extract_strided_slice %0 {offsets = [0, 8], sizes = [8, 1], strides = [1, 1]} : vector<8x12xi32> to vector<8x1xi32>
    %73 = vector.broadcast %72 : vector<8x1xi32> to vector<8x128xi32>
    %74 = arith.cmpi eq, %4, %73 : vector<8x128xi32>
    %75 = arith.ori %71, %74 : vector<8x128xi1>
    %76 = arith.extui %75 : vector<8x128xi1> to vector<8x128xi32>
    %77 = arith.sitofp %76 : vector<8x128xi32> to vector<8x128xf32>
    %cst_16 = arith.constant dense<0.000000e+00> : vector<8x32xf32>
    %78 = tpu.matmul %77, %1, %cst_16 {dimension_numbers = #tpu.dot_dimension_numbers<[1], [0], [0], [1], [0, 0, 1, 1], [], []>} : vector<8x128xf32>, vector<128x32xf32>, vector<8x32xf32> -> vector<8x32xf32>
    %cst_17 = arith.constant dense<0.000000e+00> : vector<8xf32>
    %79 = vector.multi_reduction <add>, %78, %cst_17 [1] : vector<8x32xf32> to vector<8xf32>
    %80 = vector.shape_cast %79 : vector<8xf32> to vector<8x1xf32>
    %cst_18 = arith.constant 3.200000e+01 : f32
    %81 = vector.broadcast %cst_18 : f32 to vector<8x1xf32>
    %82 = arith.divf %80, %81 : vector<8x1xf32>
    %83 = vector.broadcast %82 : vector<8x1xf32> to vector<8x32xf32>
    %84 = arith.subf %78, %83 : vector<8x32xf32>
    %85 = arith.mulf %84, %84 : vector<8x32xf32>
    %cst_19 = arith.constant dense<0.000000e+00> : vector<8xf32>
    %86 = vector.multi_reduction <add>, %85, %cst_19 [1] : vector<8x32xf32> to vector<8xf32>
    %87 = vector.shape_cast %86 : vector<8xf32> to vector<8x1xf32>
    %cst_20 = arith.constant 3.200000e+01 : f32
    %88 = vector.broadcast %cst_20 : f32 to vector<8x1xf32>
    %89 = arith.divf %87, %88 : vector<8x1xf32>
    %cst_21 = arith.constant 9.99999974E-6 : f32
    %90 = vector.broadcast %cst_21 : f32 to vector<8x1xf32>
    %91 = arith.addf %89, %90 : vector<8x1xf32>
    %92 = math.rsqrt %91 : vector<8x1xf32>
    %93 = vector.broadcast %92 : vector<8x1xf32> to vector<8x32xf32>
    %94 = arith.mulf %84, %93 : vector<8x32xf32>
    %95 = vector.extract_strided_slice %0 {offsets = [0, 9], sizes = [8, 1], strides = [1, 1]} : vector<8x12xi32> to vector<8x1xi32>
    %96 = vector.broadcast %95 : vector<8x1xi32> to vector<8x128xi32>
    %97 = arith.cmpi eq, %4, %96 : vector<8x128xi32>
    %98 = vector.extract_strided_slice %0 {offsets = [0, 10], sizes = [8, 1], strides = [1, 1]} : vector<8x12xi32> to vector<8x1xi32>
    %99 = vector.broadcast %98 : vector<8x1xi32> to vector<8x128xi32>
    %100 = arith.cmpi eq, %4, %99 : vector<8x128xi32>
    %101 = arith.ori %97, %100 : vector<8x128xi1>
    %102 = vector.extract_strided_slice %0 {offsets = [0, 11], sizes = [8, 1], strides = [1, 1]} : vector<8x12xi32> to vector<8x1xi32>
    %103 = vector.broadcast %102 : vector<8x1xi32> to vector<8x128xi32>
    %104 = arith.cmpi eq, %4, %103 : vector<8x128xi32>
    %105 = arith.ori %101, %104 : vector<8x128xi1>
    %106 = arith.extui %105 : vector<8x128xi1> to vector<8x128xi32>
    %107 = arith.sitofp %106 : vector<8x128xi32> to vector<8x128xf32>
    %cst_22 = arith.constant dense<0.000000e+00> : vector<8x32xf32>
    %108 = tpu.matmul %107, %1, %cst_22 {dimension_numbers = #tpu.dot_dimension_numbers<[1], [0], [0], [1], [0, 0, 1, 1], [], []>} : vector<8x128xf32>, vector<128x32xf32>, vector<8x32xf32> -> vector<8x32xf32>
    %cst_23 = arith.constant dense<0.000000e+00> : vector<8xf32>
    %109 = vector.multi_reduction <add>, %108, %cst_23 [1] : vector<8x32xf32> to vector<8xf32>
    %110 = vector.shape_cast %109 : vector<8xf32> to vector<8x1xf32>
    %cst_24 = arith.constant 3.200000e+01 : f32
    %111 = vector.broadcast %cst_24 : f32 to vector<8x1xf32>
    %112 = arith.divf %110, %111 : vector<8x1xf32>
    %113 = vector.broadcast %112 : vector<8x1xf32> to vector<8x32xf32>
    %114 = arith.subf %108, %113 : vector<8x32xf32>
    %115 = arith.mulf %114, %114 : vector<8x32xf32>
    %cst_25 = arith.constant dense<0.000000e+00> : vector<8xf32>
    %116 = vector.multi_reduction <add>, %115, %cst_25 [1] : vector<8x32xf32> to vector<8xf32>
    %117 = vector.shape_cast %116 : vector<8xf32> to vector<8x1xf32>
    %cst_26 = arith.constant 3.200000e+01 : f32
    %118 = vector.broadcast %cst_26 : f32 to vector<8x1xf32>
    %119 = arith.divf %117, %118 : vector<8x1xf32>
    %cst_27 = arith.constant 9.99999974E-6 : f32
    %120 = vector.broadcast %cst_27 : f32 to vector<8x1xf32>
    %121 = arith.addf %119, %120 : vector<8x1xf32>
    %122 = math.rsqrt %121 : vector<8x1xf32>
    %123 = vector.broadcast %122 : vector<8x1xf32> to vector<8x32xf32>
    %124 = arith.mulf %114, %123 : vector<8x32xf32>
    %125 = tpu.concatenate %34, %64, %94, %124 in 1 : vector<8x32xf32>, vector<8x32xf32>, vector<8x32xf32>, vector<8x32xf32> -> vector<8x128xf32>
    %126 = tpu.concatenate %2, %2, %2, %2 in 1 : vector<1x32xf32>, vector<1x32xf32>, vector<1x32xf32>, vector<1x32xf32> -> vector<1x128xf32>
    %127 = tpu.concatenate %3, %3, %3, %3 in 1 : vector<1x32xf32>, vector<1x32xf32>, vector<1x32xf32>, vector<1x32xf32> -> vector<1x128xf32>
    %128 = vector.broadcast %126 : vector<1x128xf32> to vector<8x128xf32>
    %129 = arith.mulf %125, %128 : vector<8x128xf32>
    %130 = vector.broadcast %127 : vector<1x128xf32> to vector<8x128xf32>
    %131 = arith.addf %129, %130 : vector<8x128xf32>
    %c0_28 = arith.constant 0 : index
    %c0_29 = arith.constant 0 : index
    %132 = vector.load %arg3[%c0_28, %c0_29] : memref<8x128xf32, #tpu.memory_space<vmem>>, vector<8x128xf32>
    tpu.vector_store %arg3[%c0_28, %c0_29], %131 {strides = array<i32>} : memref<8x128xf32, #tpu.memory_space<vmem>>, vector<8x128xf32>,
    return
  }
  func.func @transform_0(%arg0: i32) -> (i32, i32) {
    %c0_i32 = arith.constant 0 : i32
    %c0_i32_0 = arith.constant 0 : i32
    return %arg0, %c0_i32 : i32, i32
  }
  func.func @transform_1(%arg0: i32) -> (i32, i32) {
    %c0_i32 = arith.constant 0 : i32
    %c0_i32_0 = arith.constant 0 : i32
    %c0_i32_1 = arith.constant 0 : i32
    return %c0_i32, %c0_i32_0 : i32, i32
  }
  func.func @transform_2(%arg0: i32) -> (i32, i32) {
    %c0_i32 = arith.constant 0 : i32
    %c0_i32_0 = arith.constant 0 : i32
    return %arg0, %c0_i32 : i32, i32
  }
}

</mosaic_0001>

<llo_original>
// kernel: tpu_custom_call.1
$region0: #{tpu_custom_call.1}
  #allocation0 [shape = 'u32[]', space=smem, size = 0x4, offset = 0x4, fixed_abs, tag = 'smem constant byte address 0x4 - core index']
  #allocation1 [shape = 'u32[144,128]{1,0:T(1,128)}', space=vmem, size = 0x12000, scoped, tag = 'internal scratch']
  %s0 = inlined_call_operand.vmem [shape: s32[8,12], index: 0, kind: input, shape index: {}]
  %s1 = inlined_call_operand.vmem [shape: f32[128,32], index: 1, kind: input, shape index: {}]
  %s2 = inlined_call_operand.hbm [shape: f32[8,128], index: 2, kind: output, shape index: {}]
  %s3 = sld [smem:[#allocation0]]
  $region18: #{tpu_custom_call.1} parent=0
    _
  %s5 = ssub.s32 1, %s3
  %s6 = scalar_select 0, %s5, %s3
  $region1: #{tpu_custom_call.1} parent=0
    #allocation2 [shape = 'u8[4096]{0}', space=vmem, size = 0x1000, scoped, tag = 'output window, operand 0, single buffered']
    #allocation3 [shape = 's32[1]{0}', space=sflag, size = 0x4, scoped, tag = 'scoped memory for tpu_custom_call.1']
    %7 = vsyncpa [#allocation3], 0
    // Predicated region
    $region2: #{tpu_custom_call.1} parent=1 // pred_check
      _
    $region3: #{tpu_custom_call.1} parent=1 // pred_check_branch
      %9 = sbr.rel (0) target = $region5
    $region4: #{tpu_custom_call.1} parent=1 // pred_region
      _
    $region5: #{tpu_custom_call.1} parent=1 // pred_fallthru
      _
    // Predicated region
    $region6: #{tpu_custom_call.1} parent=1 // pred_check
      _
    $region7: #{tpu_custom_call.1} parent=1 // pred_check_branch
      %11 = sbr.rel (0) target = $region9
    $region8: #{tpu_custom_call.1} parent=1 // pred_region
      _
    $region9: #{tpu_custom_call.1} parent=1 // pred_fallthru
      _
    %v12 = vld [vmem:[%s0] sm:$0xff]
    %v13 = vld [vmem:[%s1] sm:$0xff]
    %v14 = vld [vmem:[%s1 + $0x8] sm:$0xff]
    %v15 = vld [vmem:[%s1 + $0x10] sm:$0xff]
    %v16 = vld [vmem:[%s1 + $0x18] sm:$0xff]
    %v17 = vld [vmem:[%s1 + $0x20] sm:$0xff]
    %v18 = vld [vmem:[%s1 + $0x28] sm:$0xff]
    %v19 = vld [vmem:[%s1 + $0x30] sm:$0xff]
    %v20 = vld [vmem:[%s1 + $0x38] sm:$0xff]
    %v21 = vld [vmem:[%s1 + $0x40] sm:$0xff]
    %v22 = vld [vmem:[%s1 + $0x48] sm:$0xff]
    %v23 = vld [vmem:[%s1 + $0x50] sm:$0xff]
    %v24 = vld [vmem:[%s1 + $0x58] sm:$0xff]
    %v25 = vld [vmem:[%s1 + $0x60] sm:$0xff]
    %v26 = vld [vmem:[%s1 + $0x68] sm:$0xff]
    %v27 = vld [vmem:[%s1 + $0x70] sm:$0xff]
    %v28 = vld [vmem:[%s1 + $0x78] sm:$0xff]
    %v29 = vld [vmem:[%s1 + $0x68] sm:$0x1]
    %v30 = vld [vmem:[%s1 + $0x69] sm:$0x1]
    %v31 = vlaneseq
    %v32 = vand.u32 %v31, 127
    %33 = vset.pattern.permute.xlu0 0
    %34 = vperm.xlu0 %33, %v12
    %v35 = vpop.permute.xlu0 %34
    %vm36 = vcmp.eq.s32.totalorder %v32, %v35
    %37 = vset.pattern.permute.xlu0 1
    %38 = vperm.xlu0 %37, %v12
    %v39 = vpop.permute.xlu0 %38
    %vm40 = vcmp.eq.s32.totalorder %v32, %v39
    %vm41 = vmor %vm36, %vm40
    %42 = vset.pattern.permute.xlu0 2
    %43 = vperm.xlu0 %42, %v12
    %v44 = vpop.permute.xlu0 %43
    %vm45 = vcmp.eq.s32.totalorder %v32, %v44
    %vm46 = vmor %vm41, %vm45
    %v47 = vsel %vm46, 1, 0
    %v48 = vcvt.s32.f32 %v47
    %49 = vmatprep.subr.mxu0 0.0
    %50 = vmatpush1.msra.mxu0 %v13
    %51 = vmatprep.subr.mxu0 0.0
    %52 = vmatpush1.msra.mxu0 %v14
    %53 = vmatprep.subr.mxu0 0.0
    %54 = vmatpush1.msra.mxu0 %v15
    %55 = vmatprep.subr.mxu0 0.0
    %56 = vmatpush1.msra.mxu0 %v16
    %57 = vmatprep.subr.mxu0 0.0
    %58 = vmatpush1.msra.mxu0 %v17
    %59 = vmatprep.subr.mxu0 0.0
    %60 = vmatpush1.msra.mxu0 %v18
    %61 = vmatprep.subr.mxu0 0.0
    %62 = vmatpush1.msra.mxu0 %v19
    %63 = vmatprep.subr.mxu0 0.0
    %64 = vmatpush1.msra.mxu0 %v20
    %65 = vmatprep.subr.mxu0 0.0
    %66 = vmatpush1.msra.mxu0 %v21
    %67 = vmatprep.subr.mxu0 0.0
    %68 = vmatpush1.msra.mxu0 %v22
    %69 = vmatprep.subr.mxu0 0.0
    %70 = vmatpush1.msra.mxu0 %v23
    %71 = vmatprep.subr.mxu0 0.0
    %72 = vmatpush1.msra.mxu0 %v24
    %73 = vmatprep.subr.mxu0 0.0
    %74 = vmatpush1.msra.mxu0 %v25
    %75 = vmatprep.subr.mxu0 0.0
    %76 = vmatpush1.msra.mxu0 %v26
    %77 = vmatprep.subr.mxu0 0.0
    %78 = vmatpush1.msra.mxu0 %v27
    %79 = vmatprep.subr.mxu0 0.0
    %80 = vmatpush1.msra.mxu0 %v28
    %81 = vmatprep.subr.mxu0 0.0
    %82 = vmatpush1.msra.mxu0 0.0
    %83 = vmatprep.subr.mxu0 0.0
    %84 = vmatpush1.msra.mxu0 0.0
    %85 = vmatprep.subr.mxu0 0.0
    %86 = vmatpush1.msra.mxu0 0.0
    %87 = vmatprep.subr.mxu0 0.0
    %88 = vmatpush1.msra.mxu0 0.0
    %89 = vmatprep.subr.mxu0 0.0
    %90 = vmatpush1.msra.mxu0 0.0
    %91 = vmatprep.subr.mxu0 0.0
    %92 = vmatpush1.msra.mxu0 0.0
    %93 = vmatprep.subr.mxu0 0.0
    %94 = vmatpush1.msra.mxu0 0.0
    %95 = vmatprep.subr.mxu0 0.0
    %96 = vmatpush1.msra.mxu0 0.0
    %97 = vmatprep.subr.mxu0 0.0
    %98 = vmatpush1.msra.mxu0 0.0
    %99 = vmatprep.subr.mxu0 0.0
    %100 = vmatpush1.msra.mxu0 0.0
    %101 = vmatprep.subr.mxu0 0.0
    %102 = vmatpush1.msra.mxu0 0.0
    %103 = vmatprep.subr.mxu0 0.0
    %104 = vmatpush1.msra.mxu0 0.0
    %105 = vmatprep.subr.mxu0 0.0
    %106 = vmatpush1.msra.mxu0 0.0
    %107 = vmatprep.subr.mxu0 0.0
    %108 = vmatpush1.msra.mxu0 0.0
    %109 = vmatprep.subr.mxu0 0.0
    %110 = vmatpush1.msra.mxu0 0.0
    %111 = vmatprep.subr.mxu0 0.0
    %112 = vmatpush1.msra.mxu0 0.0
    %113 = vmatprep.mubr.f32.mxu0 0.0
    %114 = vmatmul.mubr.f32.gmra.mrb[0].mxu0 %v48
    %v115 = vpop.f32.mrb[0].mxu0
    %v116 = vadd.f32 0.0, %v115
    %v117 = vpop.f32.mrb[0].mxu0
    %118 = vdwg.mxu0
    %vm119 = vcmask 261120
    %v120 = vsel %vm119, %v116, 0.0
    %121 = vadd.xlane.f32.xlu0 %v120
    %v122 = vpop.xlane.xlu0 %121
    %v123 = vrcp.pop 32.0
    %v124 = vmul.f32 %v122, %v123
    %v125 = vsub.f32 %v116, %v124
    %v126 = vmul.f32 %v125, %v125
    %v127 = vsel %vm119, %v126, 0.0
    %128 = vadd.xlane.f32.xlu0 %v127
    %v129 = vpop.xlane.xlu0 %128
    %v130 = vmul.f32 %v129, %v123
    %v131 = vadd.f32 %v130, 1e-05
    %v132 = vrsqrt.pop %v131
    %v133 = vmul.f32 %v125, %v132
    %134 = vset.pattern.permute.xlu0 3
    %135 = vperm.xlu0 %134, %v12
    %v136 = vpop.permute.xlu0 %135
    %vm137 = vcmp.eq.s32.totalorder %v32, %v136
    %138 = vset.pattern.permute.xlu0 4
    %139 = vperm.xlu0 %138, %v12
    %v140 = vpop.permute.xlu0 %139
    %vm141 = vcmp.eq.s32.totalorder %v32, %v140
    %vm142 = vmor %vm137, %vm141
    %143 = vset.pattern.permute.xlu0 5
    %144 = vperm.xlu0 %143, %v12
    %v145 = vpop.permute.xlu0 %144
    %vm146 = vcmp.eq.s32.totalorder %v32, %v145
    %vm147 = vmor %vm142, %vm146
    %v148 = vsel %vm147, 1, 0
    %v149 = vcvt.s32.f32 %v148
    %150 = vmatprep.subr.mxu0 0.0
    %151 = vmatpush1.msra.mxu0 %v13
    %152 = vmatprep.subr.mxu0 0.0
    %153 = vmatpush1.msra.mxu0 %v14
    %154 = vmatprep.subr.mxu0 0.0
    %155 = vmatpush1.msra.mxu0 %v15
    %156 = vmatprep.subr.mxu0 0.0
    %157 = vmatpush1.msra.mxu0 %v16
    %158 = vmatprep.subr.mxu0 0.0
    %159 = vmatpush1.msra.mxu0 %v17
    %160 = vmatprep.subr.mxu0 0.0
    %161 = vmatpush1.msra.mxu0 %v18
    %162 = vmatprep.subr.mxu0 0.0
    %163 = vmatpush1.msra.mxu0 %v19
    %164 = vmatprep.subr.mxu0 0.0
    %165 = vmatpush1.msra.mxu0 %v20
    %166 = vmatprep.subr.mxu0 0.0
    %167 = vmatpush1.msra.mxu0 %v21
    %168 = vmatprep.subr.mxu0 0.0
    %169 = vmatpush1.msra.mxu0 %v22
    %170 = vmatprep.subr.mxu0 0.0
    %171 = vmatpush1.msra.mxu0 %v23
    %172 = vmatprep.subr.mxu0 0.0
    %173 = vmatpush1.msra.mxu0 %v24
    %174 = vmatprep.subr.mxu0 0.0
    %175 = vmatpush1.msra.mxu0 %v25
    %176 = vmatprep.subr.mxu0 0.0
    %177 = vmatpush1.msra.mxu0 %v26
    %178 = vmatprep.subr.mxu0 0.0
    %179 = vmatpush1.msra.mxu0 %v27
    %180 = vmatprep.subr.mxu0 0.0
    %181 = vmatpush1.msra.mxu0 %v28
    %182 = vmatprep.subr.mxu0 0.0
    %183 = vmatpush1.msra.mxu0 0.0
    %184 = vmatprep.subr.mxu0 0.0
    %185 = vmatpush1.msra.mxu0 0.0
    %186 = vmatprep.subr.mxu0 0.0
    %187 = vmatpush1.msra.mxu0 0.0
    %188 = vmatprep.subr.mxu0 0.0
    %189 = vmatpush1.msra.mxu0 0.0
    %190 = vmatprep.subr.mxu0 0.0
    %191 = vmatpush1.msra.mxu0 0.0
    %192 = vmatprep.subr.mxu0 0.0
    %193 = vmatpush1.msra.mxu0 0.0
    %194 = vmatprep.subr.mxu0 0.0
    %195 = vmatpush1.msra.mxu0 0.0
    %196 = vmatprep.subr.mxu0 0.0
    %197 = vmatpush1.msra.mxu0 0.0
    %198 = vmatprep.subr.mxu0 0.0
    %199 = vmatpush1.msra.mxu0 0.0
    %200 = vmatprep.subr.mxu0 0.0
    %201 = vmatpush1.msra.mxu0 0.0
    %202 = vmatprep.subr.mxu0 0.0
    %203 = vmatpush1.msra.mxu0 0.0
    %204 = vmatprep.subr.mxu0 0.0
    %205 = vmatpush1.msra.mxu0 0.0
    %206 = vmatprep.subr.mxu0 0.0
    %207 = vmatpush1.msra.mxu0 0.0
    %208 = vmatprep.subr.mxu0 0.0
    %209 = vmatpush1.msra.mxu0 0.0
    %210 = vmatprep.subr.mxu0 0.0
    %211 = vmatpush1.msra.mxu0 0.0
    %212 = vmatprep.subr.mxu0 0.0
    %213 = vmatpush1.msra.mxu0 0.0
    %214 = vmatprep.mubr.f32.mxu0 0.0
    %215 = vmatmul.mubr.f32.gmra.mrb[0].mxu0 %v149
    %v216 = vpop.f32.mrb[0].mxu0
    %v217 = vadd.f32 0.0, %v216
    %v218 = vpop.f32.mrb[0].mxu0
    %219 = vdwg.mxu0
    %v220 = vsel %vm119, %v217, 0.0
    %221 = vadd.xlane.f32.xlu0 %v220
    %v222 = vpop.xlane.xlu0 %221
    %v223 = vmul.f32 %v222, %v123
    %v224 = vsub.f32 %v217, %v223
    %v225 = vmul.f32 %v224, %v224
    %v226 = vsel %vm119, %v225, 0.0
    %227 = vadd.xlane.f32.xlu0 %v226
    %v228 = vpop.xlane.xlu0 %227
    %v229 = vmul.f32 %v228, %v123
    %v230 = vadd.f32 %v229, 1e-05
    %v231 = vrsqrt.pop %v230
    %v232 = vmul.f32 %v224, %v231
    %233 = vset.pattern.permute.xlu0 6
    %234 = vperm.xlu0 %233, %v12
    %v235 = vpop.permute.xlu0 %234
    %vm236 = vcmp.eq.s32.totalorder %v32, %v235
    %237 = vset.pattern.permute.xlu0 7
    %238 = vperm.xlu0 %237, %v12
    %v239 = vpop.permute.xlu0 %238
    %vm240 = vcmp.eq.s32.totalorder %v32, %v239
    %vm241 = vmor %vm236, %vm240
    %242 = vset.pattern.permute.xlu0 8
    %243 = vperm.xlu0 %242, %v12
    %v244 = vpop.permute.xlu0 %243
    %vm245 = vcmp.eq.s32.totalorder %v32, %v244
    %vm246 = vmor %vm241, %vm245
    %v247 = vsel %vm246, 1, 0
    %v248 = vcvt.s32.f32 %v247
    %249 = vmatprep.subr.mxu0 0.0
    %250 = vmatpush1.msra.mxu0 %v13
    %251 = vmatprep.subr.mxu0 0.0
    %252 = vmatpush1.msra.mxu0 %v14
    %253 = vmatprep.subr.mxu0 0.0
    %254 = vmatpush1.msra.mxu0 %v15
    %255 = vmatprep.subr.mxu0 0.0
    %256 = vmatpush1.msra.mxu0 %v16
    %257 = vmatprep.subr.mxu0 0.0
    %258 = vmatpush1.msra.mxu0 %v17
    %259 = vmatprep.subr.mxu0 0.0
    %260 = vmatpush1.msra.mxu0 %v18
    %261 = vmatprep.subr.mxu0 0.0
    %262 = vmatpush1.msra.mxu0 %v19
    %263 = vmatprep.subr.mxu0 0.0
    %264 = vmatpush1.msra.mxu0 %v20
    %265 = vmatprep.subr.mxu0 0.0
    %266 = vmatpush1.msra.mxu0 %v21
    %267 = vmatprep.subr.mxu0 0.0
    %268 = vmatpush1.msra.mxu0 %v22
    %269 = vmatprep.subr.mxu0 0.0
    %270 = vmatpush1.msra.mxu0 %v23
    %271 = vmatprep.subr.mxu0 0.0
    %272 = vmatpush1.msra.mxu0 %v24
    %273 = vmatprep.subr.mxu0 0.0
    %274 = vmatpush1.msra.mxu0 %v25
    %275 = vmatprep.subr.mxu0 0.0
    %276 = vmatpush1.msra.mxu0 %v26
    %277 = vmatprep.subr.mxu0 0.0
    %278 = vmatpush1.msra.mxu0 %v27
    %279 = vmatprep.subr.mxu0 0.0
    %280 = vmatpush1.msra.mxu0 %v28
    %281 = vmatprep.subr.mxu0 0.0
    %282 = vmatpush1.msra.mxu0 0.0
    %283 = vmatprep.subr.mxu0 0.0
    %284 = vmatpush1.msra.mxu0 0.0
    %285 = vmatprep.subr.mxu0 0.0
    %286 = vmatpush1.msra.mxu0 0.0
    %287 = vmatprep.subr.mxu0 0.0
    %288 = vmatpush1.msra.mxu0 0.0
    %289 = vmatprep.subr.mxu0 0.0
    %290 = vmatpush1.msra.mxu0 0.0
    %291 = vmatprep.subr.mxu0 0.0
    %292 = vmatpush1.msra.mxu0 0.0
    %293 = vmatprep.subr.mxu0 0.0
    %294 = vmatpush1.msra.mxu0 0.0
    %295 = vmatprep.subr.mxu0 0.0
    %296 = vmatpush1.msra.mxu0 0.0
    %297 = vmatprep.subr.mxu0 0.0
    %298 = vmatpush1.msra.mxu0 0.0
    %299 = vmatprep.subr.mxu0 0.0
    %300 = vmatpush1.msra.mxu0 0.0
    %301 = vmatprep.subr.mxu0 0.0
    %302 = vmatpush1.msra.mxu0 0.0
    %303 = vmatprep.subr.mxu0 0.0
    %304 = vmatpush1.msra.mxu0 0.0
    %305 = vmatprep.subr.mxu0 0.0
    %306 = vmatpush1.msra.mxu0 0.0
    %307 = vmatprep.subr.mxu0 0.0
    %308 = vmatpush1.msra.mxu0 0.0
    %309 = vmatprep.subr.mxu0 0.0
    %310 = vmatpush1.msra.mxu0 0.0
    %311 = vmatprep.subr.mxu0 0.0
    %312 = vmatpush1.msra.mxu0 0.0
    %313 = vmatprep.mubr.f32.mxu0 0.0
    %314 = vmatmul.mubr.f32.gmra.mrb[0].mxu0 %v248
    %v315 = vpop.f32.mrb[0].mxu0
    %v316 = vadd.f32 0.0, %v315
    %v317 = vpop.f32.mrb[0].mxu0
    %318 = vdwg.mxu0
    %v319 = vsel %vm119, %v316, 0.0
    %320 = vadd.xlane.f32.xlu0 %v319
    %v321 = vpop.xlane.xlu0 %320
    %v322 = vmul.f32 %v321, %v123
    %v323 = vsub.f32 %v316, %v322
    %v324 = vmul.f32 %v323, %v323
    %v325 = vsel %vm119, %v324, 0.0
    %326 = vadd.xlane.f32.xlu0 %v325
    %v327 = vpop.xlane.xlu0 %326
    %v328 = vmul.f32 %v327, %v123
    %v329 = vadd.f32 %v328, 1e-05
    %v330 = vrsqrt.pop %v329
    %v331 = vmul.f32 %v323, %v330
    %332 = vset.pattern.permute.xlu0 9
    %333 = vperm.xlu0 %332, %v12
    %v334 = vpop.permute.xlu0 %333
    %vm335 = vcmp.eq.s32.totalorder %v32, %v334
    %336 = vset.pattern.permute.xlu0 10
    %337 = vperm.xlu0 %336, %v12
    %v338 = vpop.permute.xlu0 %337
    %vm339 = vcmp.eq.s32.totalorder %v32, %v338
    %vm340 = vmor %vm335, %vm339
    %341 = vset.pattern.permute.xlu0 11
    %342 = vperm.xlu0 %341, %v12
    %v343 = vpop.permute.xlu0 %342
    %vm344 = vcmp.eq.s32.totalorder %v32, %v343
    %vm345 = vmor %vm340, %vm344
    %v346 = vsel %vm345, 1, 0
    %v347 = vcvt.s32.f32 %v346
    %348 = vmatprep.subr.mxu0 0.0
    %349 = vmatpush1.msra.mxu0 %v13
    %350 = vmatprep.subr.mxu0 0.0
    %351 = vmatpush1.msra.mxu0 %v14
    %352 = vmatprep.subr.mxu0 0.0
    %353 = vmatpush1.msra.mxu0 %v15
    %354 = vmatprep.subr.mxu0 0.0
    %355 = vmatpush1.msra.mxu0 %v16
    %356 = vmatprep.subr.mxu0 0.0
    %357 = vmatpush1.msra.mxu0 %v17
    %358 = vmatprep.subr.mxu0 0.0
    %359 = vmatpush1.msra.mxu0 %v18
    %360 = vmatprep.subr.mxu0 0.0
    %361 = vmatpush1.msra.mxu0 %v19
    %362 = vmatprep.subr.mxu0 0.0
    %363 = vmatpush1.msra.mxu0 %v20
    %364 = vmatprep.subr.mxu0 0.0
    %365 = vmatpush1.msra.mxu0 %v21
    %366 = vmatprep.subr.mxu0 0.0
    %367 = vmatpush1.msra.mxu0 %v22
    %368 = vmatprep.subr.mxu0 0.0
    %369 = vmatpush1.msra.mxu0 %v23
    %370 = vmatprep.subr.mxu0 0.0
    %371 = vmatpush1.msra.mxu0 %v24
    %372 = vmatprep.subr.mxu0 0.0
    %373 = vmatpush1.msra.mxu0 %v25
    %374 = vmatprep.subr.mxu0 0.0
    %375 = vmatpush1.msra.mxu0 %v26
    %376 = vmatprep.subr.mxu0 0.0
    %377 = vmatpush1.msra.mxu0 %v27
    %378 = vmatprep.subr.mxu0 0.0
    %379 = vmatpush1.msra.mxu0 %v28
    %380 = vmatprep.subr.mxu0 0.0
    %381 = vmatpush1.msra.mxu0 0.0
    %382 = vmatprep.subr.mxu0 0.0
    %383 = vmatpush1.msra.mxu0 0.0
    %384 = vmatprep.subr.mxu0 0.0
    %385 = vmatpush1.msra.mxu0 0.0
    %386 = vmatprep.subr.mxu0 0.0
    %387 = vmatpush1.msra.mxu0 0.0
    %388 = vmatprep.subr.mxu0 0.0
    %389 = vmatpush1.msra.mxu0 0.0
    %390 = vmatprep.subr.mxu0 0.0
    %391 = vmatpush1.msra.mxu0 0.0
    %392 = vmatprep.subr.mxu0 0.0
    %393 = vmatpush1.msra.mxu0 0.0
    %394 = vmatprep.subr.mxu0 0.0
    %395 = vmatpush1.msra.mxu0 0.0
    %396 = vmatprep.subr.mxu0 0.0
    %397 = vmatpush1.msra.mxu0 0.0
    %398 = vmatprep.subr.mxu0 0.0
    %399 = vmatpush1.msra.mxu0 0.0
    %400 = vmatprep.subr.mxu0 0.0
    %401 = vmatpush1.msra.mxu0 0.0
    %402 = vmatprep.subr.mxu0 0.0
    %403 = vmatpush1.msra.mxu0 0.0
    %404 = vmatprep.subr.mxu0 0.0
    %405 = vmatpush1.msra.mxu0 0.0
    %406 = vmatprep.subr.mxu0 0.0
    %407 = vmatpush1.msra.mxu0 0.0
    %408 = vmatprep.subr.mxu0 0.0
    %409 = vmatpush1.msra.mxu0 0.0
    %410 = vmatprep.subr.mxu0 0.0
    %411 = vmatpush1.msra.mxu0 0.0
    %412 = vmatprep.mubr.f32.mxu0 0.0
    %413 = vmatmul.mubr.f32.gmra.mrb[0].mxu0 %v347
    %v414 = vpop.f32.mrb[0].mxu0
    %v415 = vadd.f32 0.0, %v414
    %v416 = vpop.f32.mrb[0].mxu0
    %417 = vdwg.mxu0
    %v418 = vsel %vm119, %v415, 0.0
    %419 = vadd.xlane.f32.xlu0 %v418
    %v420 = vpop.xlane.xlu0 %419
    %v421 = vmul.f32 %v420, %v123
    %v422 = vsub.f32 %v415, %v421
    %v423 = vmul.f32 %v422, %v422
    %v424 = vsel %vm119, %v423, 0.0
    %425 = vadd.xlane.f32.xlu0 %v424
    %v426 = vpop.xlane.xlu0 %425
    %v427 = vmul.f32 %v426, %v123
    %v428 = vadd.f32 %v427, 1e-05
    %v429 = vrsqrt.pop %v428
    %v430 = vmul.f32 %v422, %v429
    %432 = vrot.lane.b32.xlu0 %v232, 32
    %v433 = vpop.permute.xlu0 %432
    %436 = vrot.lane.b32.xlu0 %v331, 64
    %v437 = vpop.permute.xlu0 %436
    %440 = vrot.lane.b32.xlu0 %v430, 96
    %v441 = vpop.permute.xlu0 %440
    %v443 = vsel %vm119, %v133, %v433
    %vm444 = vcmask 523264
    %v445 = vsel %vm444, %v443, %v437
    %vm446 = vcmask 785408
    %v447 = vsel %vm446, %v445, %v441
    %449 = vrot.lane.b32.xlu0 %v29, 32
    %v450 = vpop.permute.xlu0 %449
    %452 = vrot.lane.b32.xlu0 %v29, 64
    %v453 = vpop.permute.xlu0 %452
    %455 = vrot.lane.b32.xlu0 %v29, 96
    %v456 = vpop.permute.xlu0 %455
    %v458 = vsel %vm119, %v29, %v450
    %v459 = vsel %vm444, %v458, %v453
    %v460 = vsel %vm446, %v459, %v456
    %462 = vrot.lane.b32.xlu0 %v30, 32
    %v463 = vpop.permute.xlu0 %462
    %465 = vrot.lane.b32.xlu0 %v30, 64
    %v466 = vpop.permute.xlu0 %465
    %468 = vrot.lane.b32.xlu0 %v30, 96
    %v469 = vpop.permute.xlu0 %468
    %v471 = vsel %vm119, %v30, %v463
    %v472 = vsel %vm444, %v471, %v466
    %v473 = vsel %vm446, %v472, %v469
    %v474 = vlaneseq
    %v475 = vshrl.u32 %v474, 7
    %v476 = vsub.s32 0, %v475
    %v477 = vrot.slane %v460, %v476
    %v478 = vmul.f32 %v447, %v477
    %v479 = vlaneseq
    %v480 = vshrl.u32 %v479, 7
    %v481 = vsub.s32 0, %v480
    %v482 = vrot.slane %v473, %v481
    %v483 = vadd.f32 %v478, %v482
    %484 = vst [vmem:[#allocation2] sm:$0xff] %v483
    // Predicated region
    $region10: #{tpu_custom_call.1} parent=1 // pred_check
      _
    $region11: #{tpu_custom_call.1} parent=1 // pred_check_branch
      %486 = sbr.rel (0) target = $region13
    $region12: #{tpu_custom_call.1} parent=1 // pred_region
      %s488 = ssub.s32 128, 128
      %489 = vsyncadd [#allocation3], %s488
      %s491 = sshll.u32 [#allocation2], 4
      %s492 = int_to_ptr.vmem [resolvable:$true] %s491
      %494 = dma.vmem_to_hbm [thread:$0]  %s492, 128, %s2, [#allocation3]
    $region13: #{tpu_custom_call.1} parent=1 // pred_fallthru
      _
    // Predicated region
    $region14: #{tpu_custom_call.1} parent=1 // pred_check
      _
    $region15: #{tpu_custom_call.1} parent=1 // pred_check_branch
      %496 = sbr.rel (0) target = $region17
    $region16: #{tpu_custom_call.1} parent=1 // pred_region
      %497 = dma.done [#allocation3], 128
    $region17: #{tpu_custom_call.1} parent=1 // pred_fallthru
      _
    %498 = vsyncpa [#allocation3], 1

</llo_original>
